<compile_context>
chip_gen: v7x
topology: tpu7x:2x2x1
jax: 0.10.0
libtpu: 0.0.40
codegen_flags: <defaults>
</compile_context>

<pallas_src>
import functools

import jax
import jax.numpy as jnp
from jax.experimental import pallas as pl
from jax.experimental.pallas import tpu as pltpu

HIDDEN = 32          # LSTM hidden size
LANE = 128           # TPU lane width
_TB_CAP = 512        # max batch rows per grid step
# weight-slab rows after the W1 segment: W2(128)+W3(128)+Wih0(128)+Wih1(32)+Wv1(32)+Wv2(128)
_W_EXTRA_ROWS = 128 + 128 + 128 + HIDDEN + HIDDEN + 128   # = 576


# ----------------------------- kernel helpers ------------------------------

def _layernorm(x, gamma, beta, *, d, eps=1e-5):
    # PyTorch nn.LayerNorm (biased variance, eps=1e-5) in sum / sum-of-squares
    # form: the two lane reductions are independent, shortening the XLU chain.
    # `x` may be zero-padded past column d; sums only see the true features and
    # the zero-padded gamma/beta force padded lanes back to exactly 0.
    inv_d = 1.0 / d
    s = jnp.sum(x, axis=-1, keepdims=True)
    ss = jnp.sum(x * x, axis=-1, keepdims=True)
    mean = s * inv_d
    var = jnp.maximum(ss * inv_d - mean * mean, 0.0)
    return (x - mean) * jax.lax.rsqrt(var + eps) * gamma + beta


def _sigmoid(x):
    # sigmoid(x) == 0.5 * tanh(0.5 * x) + 0.5  -> single EUP push (tanh) instead
    # of exp + reciprocal; the muls/adds ride the VPU slots.
    return 0.5 * jnp.tanh(0.5 * x) + 0.5


def _lstm_cell_step(gates):
    # PyTorch gate order: i, f, g, o.  seq_len == 1 with zero initial (h, c), so
    # the f-gate is dead (f * c_prev == 0).  One full-vreg sigmoid yields i and o
    # in a single EUP push; only g and c need a tanh.
    sig = _sigmoid(gates)
    i = sig[:, 0 * HIDDEN:1 * HIDDEN]
    o = sig[:, 3 * HIDDEN:4 * HIDDEN]
    g = jnp.tanh(gates[:, 2 * HIDDEN:3 * HIDDEN])
    c = i * g
    return o * jnp.tanh(c)


# --------------------------------- kernel ----------------------------------

def dqn_kernel(x_ref, w_ref, b_ref, out_ref, *, kp):
    x = x_ref[...]            # (TB, kp) f32
    bias = b_ref[...]         # (16, 128) f32: all biases / LayerNorm gamma-beta rows

    off = 0

    def wseg(rows):
        nonlocal off
        seg = w_ref[off:off + rows, :]     # static, 16-aligned bf16 row slice; 128 lanes
        off += rows
        return seg

    def dot(a, w):
        # bf16 x bf16 -> f32 accumulate: single native MXU pass on v5e/v6e/v7x.
        return jnp.dot(a.astype(jnp.bfloat16), w, preferred_element_type=jnp.float32)

    # ---- feature_net: (Linear -> LayerNorm -> ReLU) x 3, all lane-dense ----
    h = dot(x, wseg(kp)) + bias[0:1, :]
    h = jnp.maximum(_layernorm(h, bias[1:2, :], bias[2:3, :], d=128), 0.0)

    h = dot(h, wseg(128)) + bias[3:4, :]          # W2 cols 64..127 are 0
    h = jnp.maximum(_layernorm(h, bias[4:5, :], bias[5:6, :], d=64), 0.0)

    h = dot(h, wseg(128)) + bias[6:7, :]          # W3 rows/cols 64..127 are 0
    h = jnp.maximum(_layernorm(h, bias[7:8, :], bias[8:9, :], d=64), 0.0)

    # ---- 2-layer LSTM, seq_len == 1, zero initial state ----
    h = _lstm_cell_step(dot(h, wseg(128)) + bias[9:10, :])        # folded b_ih + b_hh
    h = _lstm_cell_step(dot(h, wseg(HIDDEN)) + bias[10:11, :])

    # ---- value_net: Linear -> LayerNorm -> ReLU -> Linear(32, 3) ----
    v = dot(h, wseg(HIDDEN)) + bias[11:12, :]     # Wv1 cols 32..127 are 0
    v = jnp.maximum(_layernorm(v, bias[12:13, :], bias[13:14, :], d=HIDDEN), 0.0)
    # wv2 / bv2 are zero-padded to 128 output lanes -> lane-dense (unmasked) store.
    out_ref[...] = dot(v, wseg(128)) + bias[14:15, :]


# -------------------------------- wrapper -----------------------------------

def _batch_tiling(B):
    """Pick (tb, padded_B).  Cap tb at 512 rows; aim for an even number (>=2)
    of grid steps so v7x can shard the 'parallel' batch axis over both TCs."""
    b8 = ((B + 7) // 8) * 8
    if b8 <= 8:
        tb = 8
    else:
        nsteps = max(2, 2 * ((b8 + 2 * _TB_CAP - 1) // (2 * _TB_CAP)))
        tb = (((b8 + nsteps - 1) // nsteps + 7) // 8) * 8
    bp = ((b8 + tb - 1) // tb) * tb
    return tb, bp


def dqn_forward(x, w_slab, b_slab):
    """x: (B, input_size) float32 -> (B, 3) float32 Q-values."""
    x = x.astype(jnp.float32)
    B = x.shape[0]
    kp = w_slab.shape[0] - _W_EXTRA_ROWS          # padded input feature count

    tb, bp = _batch_tiling(B)

    # Only materialize a padded copy of x when padding is actually needed.
    if bp != B or kp != x.shape[1]:
        x_pad = jnp.pad(x, ((0, bp - B), (0, kp - x.shape[1])))
    else:
        x_pad = x

    out = pl.pallas_call(
        functools.partial(dqn_kernel, kp=kp),
        out_shape=jax.ShapeDtypeStruct((bp, LANE), jnp.float32),
        grid_spec=pltpu.PrefetchScalarGridSpec(
            num_scalar_prefetch=0,
            grid=(bp // tb,),
            in_specs=[
                pl.BlockSpec((tb, kp), lambda i: (i, 0)),          # per-step x tile
                pl.BlockSpec(w_slab.shape, lambda i: (0, 0)),      # weights resident
                pl.BlockSpec(b_slab.shape, lambda i: (0, 0)),      # biases resident
            ],
            out_specs=pl.BlockSpec((tb, LANE), lambda i: (i, 0)),
        ),
        compiler_params=pltpu.CompilerParams(
            dimension_semantics=("parallel",)),                    # both TCs on v7x
    )(x_pad, w_slab, b_slab)
    return out[:B, :3]


# --------------------------- parameter packing ------------------------------

def pack_params(p, input_size):
    """Pack PyTorch-layout parameters into the two kernel slabs.

    Weight slab rows (bf16): [W1 (kp) | W2 (128) | W3 (128) | Wih0 (128) |
    Wih1 (32) | Wv1 (32) | Wv2 (128)], each transposed to (in, out) and
    zero-padded to 128 output lanes (and to the listed input-row count).
    Bias slab (f32): 16 rows of 128 lanes.
    """
    kp = ((input_size + 15) // 16) * 16   # 16-aligned so bf16 row slices stay tile-aligned

    def wpad(w, rows):                      # w: (out, in) PyTorch layout
        wt = w.T.astype(jnp.float32)        # (in, out)
        wt = jnp.pad(wt, ((0, rows - wt.shape[0]), (0, LANE - wt.shape[1])))
        return wt.astype(jnp.bfloat16)

    def vrow(v):                            # (d,) -> (1, 128) f32
        v = v.astype(jnp.float32).reshape(1, -1)
        return jnp.pad(v, ((0, 0), (0, LANE - v.shape[1])))

    w_slab = jnp.concatenate([
        wpad(p['w1'], kp), wpad(p['w2'], 128), wpad(p['w3'], 128),
        wpad(p['wih0'], 128), wpad(p['wih1'], HIDDEN),
        wpad(p['wv1'], HIDDEN), wpad(p['wv2'], 128),
    ], axis=0)

    b_slab = jnp.concatenate([
        vrow(p['b1']), vrow(p['g1']), vrow(p['e1']),
        vrow(p['b2']), vrow(p['g2']), vrow(p['e2']),
        vrow(p['b3']), vrow(p['g3']), vrow(p['e3']),
        vrow(p['bih0'] + p['bhh0']),          # folded LSTM layer-0 bias
        vrow(p['bih1'] + p['bhh1']),          # folded LSTM layer-1 bias
        vrow(p['bv1']), vrow(p['gv']), vrow(p['ev']),
        vrow(p['bv2']),
        jnp.zeros((1, LANE), jnp.float32),    # pad to 16 rows (sublane multiple)
    ], axis=0)
    return w_slab, b_slab


def init_params(key, input_size):
    """Deterministic init mirroring the module: orthogonal(gain=1.414) Linear
    weights with zero bias, LayerNorm weight=1/bias=0, LSTM uniform(+-1/sqrt(32)).
    W_hh / h0 / c0 are unused (seq_len=1, zero initial state) so not generated."""
    keys = jax.random.split(key, 7)
    orth = jax.nn.initializers.orthogonal(scale=1.414)
    k = 1.0 / jnp.sqrt(jnp.float32(HIDDEN))

    def lin(kk, din, dout):
        return orth(kk, (dout, din), jnp.float32), jnp.zeros((dout,), jnp.float32)

    def ln(d):
        return jnp.ones((d,), jnp.float32), jnp.zeros((d,), jnp.float32)

    def lstm_layer(kk, din):
        kw, kbi, kbh = jax.random.split(kk, 3)
        wih = jax.random.uniform(kw, (4 * HIDDEN, din), jnp.float32, -k, k)
        bih = jax.random.uniform(kbi, (4 * HIDDEN,), jnp.float32, -k, k)
        bhh = jax.random.uniform(kbh, (4 * HIDDEN,), jnp.float32, -k, k)
        return wih, bih, bhh

    w1, b1 = lin(keys[0], input_size, 128); g1, e1 = ln(128)
    w2, b2 = lin(keys[1], 128, 64);         g2, e2 = ln(64)
    w3, b3 = lin(keys[2], 64, 64);          g3, e3 = ln(64)
    wih0, bih0, bhh0 = lstm_layer(keys[3], 64)
    wih1, bih1, bhh1 = lstm_layer(keys[4], HIDDEN)
    wv1, bv1 = lin(keys[5], HIDDEN, 32);    gv, ev = ln(32)
    wv2, bv2 = lin(keys[6], 32, 3)

    return dict(w1=w1, b1=b1, g1=g1, e1=e1, w2=w2, b2=b2, g2=g2, e2=e2,
                w3=w3, b3=b3, g3=g3, e3=e3,
                wih0=wih0, bih0=bih0, bhh0=bhh0,
                wih1=wih1, bih1=bih1, bhh1=bhh1,
                wv1=wv1, bv1=bv1, gv=gv, ev=ev, wv2=wv2, bv2=bv2)


def dqn_reference(x, p, *, bf16_matmul=False):
    """Pure-JAX reference matching the PyTorch forward.  With bf16_matmul=True
    the matmul operands are cast to bf16 (f32 accumulation) to mirror the
    kernel's MXU numerics; with False it is the exact f32 spec."""
    def mm(a, w):                     # w: (out, in) PyTorch layout
        if bf16_matmul:
            return jnp.dot(a.astype(jnp.bfloat16), w.T.astype(jnp.bfloat16),
                           preferred_element_type=jnp.float32)
        return a @ w.T

    def ln(h, g, b, eps=1e-5):
        m = jnp.mean(h, axis=-1, keepdims=True)
        v = jnp.mean((h - m) ** 2, axis=-1, keepdims=True)
        return (h - m) / jnp.sqrt(v + eps) * g + b

    h = mm(x, p['w1']) + p['b1']; h = jax.nn.relu(ln(h, p['g1'], p['e1']))
    h = mm(h, p['w2']) + p['b2']; h = jax.nn.relu(ln(h, p['g2'], p['e2']))
    h = mm(h, p['w3']) + p['b3']; h = jax.nn.relu(ln(h, p['g3'], p['e3']))

    def lstm(h, wih, bih, bhh):
        gates = mm(h, wih) + bih + bhh
        i, f, g, o = jnp.split(gates, 4, axis=-1)
        c = jax.nn.sigmoid(i) * jnp.tanh(g)          # f * c_prev == 0
        return jax.nn.sigmoid(o) * jnp.tanh(c)

    h = lstm(h, p['wih0'], p['bih0'], p['bhh0'])
    h = lstm(h, p['wih1'], p['bih1'], p['bhh1'])

    v = mm(h, p['wv1']) + p['bv1']; v = jax.nn.relu(ln(v, p['gv'], p['ev']))
    return mm(v, p['wv2']) + p['bv2']


if __name__ == "__main__":
    key = jax.random.PRNGKey(0)
    input_size = 16   # OHLCV-derived feature vector size (synthetic)
    batch = 2

    kx, kparam = jax.random.split(key)
    x = jax.random.normal(kx, (batch, input_size), jnp.float32)
    params = init_params(kparam, input_size)
    w_slab, b_slab = pack_params(params, input_size)

    out = dqn_forward(x, w_slab, b_slab)
    out = jax.block_until_ready(out)

    assert out.shape == (batch, 3) and out.dtype == jnp.float32
    assert bool(jnp.all(jnp.isfinite(out)))

    # Matched-precision reference (bf16 matmul operands, like the kernel's MXU path).
    ref_matched = dqn_reference(x, params, bf16_matmul=True)
    err_matched = float(jnp.max(jnp.abs(out - ref_matched)))
    assert err_matched < 2e-2, f"mismatch vs bf16-matmul reference: {err_matched}"

    # Exact f32 spec (PyTorch semantics) — loose sanity bound for bf16 matmuls.
    ref_exact = dqn_reference(x, params, bf16_matmul=False)
    err_exact = float(jnp.max(jnp.abs(out - ref_exact)))
    assert err_exact < 1e-1, f"mismatch vs exact f32 reference: {err_exact}"

    print("KERNEL_OK")
</pallas_src>

<mosaic_0001>
module attributes {stable_mosaic.version = 11 : i64} {
  func.func @dqn_kernel(%arg0: i32, %arg1: memref<8x16xf32, #tpu.memory_space<vmem>>, %arg2: memref<592x128xbf16, #tpu.memory_space<vmem>>, %arg3: memref<16x128xf32, #tpu.memory_space<vmem>>, %arg4: memref<8x128xf32, #tpu.memory_space<vmem>>) attributes {dimension_semantics = [#tpu.dimension_semantics<parallel>], iteration_bounds = array<i64: 1>, scalar_prefetch = 0 : i64, scratch_operands = 0 : i64, tpu.core_type = #tpu.core_type<tc>, window_params = [{transform_indices = @transform_0, window_bounds = array<i64: 8, 16>}, {pipeline_mode = #tpu.pipeline_mode<synchronous>, transform_indices = @transform_1, window_bounds = array<i64: 592, 128>}, {pipeline_mode = #tpu.pipeline_mode<synchronous>, transform_indices = @transform_2, window_bounds = array<i64: 16, 128>}, {transform_indices = @transform_3, window_bounds = array<i64: 8, 128>}]} {
    %c0 = arith.constant 0 : index
    %c0_0 = arith.constant 0 : index
    %0 = vector.load %arg1[%c0, %c0_0] : memref<8x16xf32, #tpu.memory_space<vmem>>, vector<8x16xf32>
    %c0_1 = arith.constant 0 : index
    %c0_2 = arith.constant 0 : index
    %1 = vector.load %arg3[%c0_1, %c0_2] : memref<16x128xf32, #tpu.memory_space<vmem>>, vector<16x128xf32>
    %c0_3 = arith.constant 0 : index
    %c0_4 = arith.constant 0 : index
    %2 = vector.load %arg2[%c0_3, %c0_4] : memref<592x128xbf16, #tpu.memory_space<vmem>>, vector<16x128xbf16>
    %3 = arith.truncf %0 : vector<8x16xf32> to vector<8x16xbf16>
    %cst = arith.constant dense<0.000000e+00> : vector<8x128xf32>
    %4 = tpu.matmul %3, %2, %cst {dimension_numbers = #tpu.dot_dimension_numbers<[1], [0], [0], [1], [0, 0, 1, 1], [], []>} : vector<8x16xbf16>, vector<16x128xbf16>, vector<8x128xf32> -> vector<8x128xf32>
    %5 = vector.extract_strided_slice %1 {offsets = [0, 0], sizes = [1, 128], strides = [1, 1]} : vector<16x128xf32> to vector<1x128xf32>
    %6 = vector.broadcast %5 : vector<1x128xf32> to vector<8x128xf32>
    %7 = arith.addf %4, %6 : vector<8x128xf32>
    %8 = vector.extract_strided_slice %1 {offsets = [1, 0], sizes = [1, 128], strides = [1, 1]} : vector<16x128xf32> to vector<1x128xf32>
    %9 = vector.extract_strided_slice %1 {offsets = [2, 0], sizes = [1, 128], strides = [1, 1]} : vector<16x128xf32> to vector<1x128xf32>
    %cst_5 = arith.constant dense<0.000000e+00> : vector<8xf32>
    %10 = vector.multi_reduction <add>, %7, %cst_5 [1] : vector<8x128xf32> to vector<8xf32>
    %11 = vector.shape_cast %10 : vector<8xf32> to vector<8x1xf32>
    %12 = arith.mulf %7, %7 : vector<8x128xf32>
    %cst_6 = arith.constant dense<0.000000e+00> : vector<8xf32>
    %13 = vector.multi_reduction <add>, %12, %cst_6 [1] : vector<8x128xf32> to vector<8xf32>
    %14 = vector.shape_cast %13 : vector<8xf32> to vector<8x1xf32>
    %cst_7 = arith.constant 7.812500e-03 : f32
    %15 = vector.broadcast %cst_7 : f32 to vector<8x1xf32>
    %16 = arith.mulf %11, %15 : vector<8x1xf32>
    %cst_8 = arith.constant 7.812500e-03 : f32
    %17 = vector.broadcast %cst_8 : f32 to vector<8x1xf32>
    %18 = arith.mulf %14, %17 : vector<8x1xf32>
    %19 = arith.mulf %16, %16 : vector<8x1xf32>
    %20 = arith.subf %18, %19 : vector<8x1xf32>
    %cst_9 = arith.constant 0.000000e+00 : f32
    %21 = vector.broadcast %cst_9 : f32 to vector<8x1xf32>
    %22 = arith.maximumf %20, %21 : vector<8x1xf32>
    %23 = vector.broadcast %16 : vector<8x1xf32> to vector<8x128xf32>
    %24 = arith.subf %7, %23 : vector<8x128xf32>
    %cst_10 = arith.constant 9.99999974E-6 : f32
    %25 = vector.broadcast %cst_10 : f32 to vector<8x1xf32>
    %26 = arith.addf %22, %25 : vector<8x1xf32>
    %27 = math.rsqrt %26 : vector<8x1xf32>
    %28 = vector.broadcast %27 : vector<8x1xf32> to vector<8x128xf32>
    %29 = arith.mulf %24, %28 : vector<8x128xf32>
    %30 = vector.broadcast %8 : vector<1x128xf32> to vector<8x128xf32>
    %31 = arith.mulf %29, %30 : vector<8x128xf32>
    %32 = vector.broadcast %9 : vector<1x128xf32> to vector<8x128xf32>
    %33 = arith.addf %31, %32 : vector<8x128xf32>
    %cst_11 = arith.constant 0.000000e+00 : f32
    %34 = vector.broadcast %cst_11 : f32 to vector<8x128xf32>
    %35 = arith.maximumf %33, %34 : vector<8x128xf32>
    %c16 = arith.constant 16 : index
    %c0_12 = arith.constant 0 : index
    %36 = vector.load %arg2[%c16, %c0_12] : memref<592x128xbf16, #tpu.memory_space<vmem>>, vector<128x128xbf16>
    %37 = arith.truncf %35 : vector<8x128xf32> to vector<8x128xbf16>
    %cst_13 = arith.constant dense<0.000000e+00> : vector<8x128xf32>
    %38 = tpu.matmul %37, %36, %cst_13 {dimension_numbers = #tpu.dot_dimension_numbers<[1], [0], [0], [1], [0, 0, 1, 1], [], []>} : vector<8x128xbf16>, vector<128x128xbf16>, vector<8x128xf32> -> vector<8x128xf32>
    %39 = vector.extract_strided_slice %1 {offsets = [3, 0], sizes = [1, 128], strides = [1, 1]} : vector<16x128xf32> to vector<1x128xf32>
    %40 = vector.broadcast %39 : vector<1x128xf32> to vector<8x128xf32>
    %41 = arith.addf %38, %40 : vector<8x128xf32>
    %42 = vector.extract_strided_slice %1 {offsets = [4, 0], sizes = [1, 128], strides = [1, 1]} : vector<16x128xf32> to vector<1x128xf32>
    %43 = vector.extract_strided_slice %1 {offsets = [5, 0], sizes = [1, 128], strides = [1, 1]} : vector<16x128xf32> to vector<1x128xf32>
    %cst_14 = arith.constant dense<0.000000e+00> : vector<8xf32>
    %44 = vector.multi_reduction <add>, %41, %cst_14 [1] : vector<8x128xf32> to vector<8xf32>
    %45 = vector.shape_cast %44 : vector<8xf32> to vector<8x1xf32>
    %46 = arith.mulf %41, %41 : vector<8x128xf32>
    %cst_15 = arith.constant dense<0.000000e+00> : vector<8xf32>
    %47 = vector.multi_reduction <add>, %46, %cst_15 [1] : vector<8x128xf32> to vector<8xf32>
    %48 = vector.shape_cast %47 : vector<8xf32> to vector<8x1xf32>
    %cst_16 = arith.constant 1.562500e-02 : f32
    %49 = vector.broadcast %cst_16 : f32 to vector<8x1xf32>
    %50 = arith.mulf %45, %49 : vector<8x1xf32>
    %cst_17 = arith.constant 1.562500e-02 : f32
    %51 = vector.broadcast %cst_17 : f32 to vector<8x1xf32>
    %52 = arith.mulf %48, %51 : vector<8x1xf32>
    %53 = arith.mulf %50, %50 : vector<8x1xf32>
    %54 = arith.subf %52, %53 : vector<8x1xf32>
    %cst_18 = arith.constant 0.000000e+00 : f32
    %55 = vector.broadcast %cst_18 : f32 to vector<8x1xf32>
    %56 = arith.maximumf %54, %55 : vector<8x1xf32>
    %57 = vector.broadcast %50 : vector<8x1xf32> to vector<8x128xf32>
    %58 = arith.subf %41, %57 : vector<8x128xf32>
    %cst_19 = arith.constant 9.99999974E-6 : f32
    %59 = vector.broadcast %cst_19 : f32 to vector<8x1xf32>
    %60 = arith.addf %56, %59 : vector<8x1xf32>
    %61 = math.rsqrt %60 : vector<8x1xf32>
    %62 = vector.broadcast %61 : vector<8x1xf32> to vector<8x128xf32>
    %63 = arith.mulf %58, %62 : vector<8x128xf32>
    %64 = vector.broadcast %42 : vector<1x128xf32> to vector<8x128xf32>
    %65 = arith.mulf %63, %64 : vector<8x128xf32>
    %66 = vector.broadcast %43 : vector<1x128xf32> to vector<8x128xf32>
    %67 = arith.addf %65, %66 : vector<8x128xf32>
    %cst_20 = arith.constant 0.000000e+00 : f32
    %68 = vector.broadcast %cst_20 : f32 to vector<8x128xf32>
    %69 = arith.maximumf %67, %68 : vector<8x128xf32>
    %c144 = arith.constant 144 : index
    %c0_21 = arith.constant 0 : index
    %70 = vector.load %arg2[%c144, %c0_21] : memref<592x128xbf16, #tpu.memory_space<vmem>>, vector<128x128xbf16>
    %71 = arith.truncf %69 : vector<8x128xf32> to vector<8x128xbf16>
    %cst_22 = arith.constant dense<0.000000e+00> : vector<8x128xf32>
    %72 = tpu.matmul %71, %70, %cst_22 {dimension_numbers = #tpu.dot_dimension_numbers<[1], [0], [0], [1], [0, 0, 1, 1], [], []>} : vector<8x128xbf16>, vector<128x128xbf16>, vector<8x128xf32> -> vector<8x128xf32>
    %73 = vector.extract_strided_slice %1 {offsets = [6, 0], sizes = [1, 128], strides = [1, 1]} : vector<16x128xf32> to vector<1x128xf32>
    %74 = vector.broadcast %73 : vector<1x128xf32> to vector<8x128xf32>
    %75 = arith.addf %72, %74 : vector<8x128xf32>
    %76 = vector.extract_strided_slice %1 {offsets = [7, 0], sizes = [1, 128], strides = [1, 1]} : vector<16x128xf32> to vector<1x128xf32>
    %77 = vector.extract_strided_slice %1 {offsets = [8, 0], sizes = [1, 128], strides = [1, 1]} : vector<16x128xf32> to vector<1x128xf32>
    %cst_23 = arith.constant dense<0.000000e+00> : vector<8xf32>
    %78 = vector.multi_reduction <add>, %75, %cst_23 [1] : vector<8x128xf32> to vector<8xf32>
    %79 = vector.shape_cast %78 : vector<8xf32> to vector<8x1xf32>
    %80 = arith.mulf %75, %75 : vector<8x128xf32>
    %cst_24 = arith.constant dense<0.000000e+00> : vector<8xf32>
    %81 = vector.multi_reduction <add>, %80, %cst_24 [1] : vector<8x128xf32> to vector<8xf32>
    %82 = vector.shape_cast %81 : vector<8xf32> to vector<8x1xf32>
    %cst_25 = arith.constant 1.562500e-02 : f32
    %83 = vector.broadcast %cst_25 : f32 to vector<8x1xf32>
    %84 = arith.mulf %79, %83 : vector<8x1xf32>
    %cst_26 = arith.constant 1.562500e-02 : f32
    %85 = vector.broadcast %cst_26 : f32 to vector<8x1xf32>
    %86 = arith.mulf %82, %85 : vector<8x1xf32>
    %87 = arith.mulf %84, %84 : vector<8x1xf32>
    %88 = arith.subf %86, %87 : vector<8x1xf32>
    %cst_27 = arith.constant 0.000000e+00 : f32
    %89 = vector.broadcast %cst_27 : f32 to vector<8x1xf32>
    %90 = arith.maximumf %88, %89 : vector<8x1xf32>
    %91 = vector.broadcast %84 : vector<8x1xf32> to vector<8x128xf32>
    %92 = arith.subf %75, %91 : vector<8x128xf32>
    %cst_28 = arith.constant 9.99999974E-6 : f32
    %93 = vector.broadcast %cst_28 : f32 to vector<8x1xf32>
    %94 = arith.addf %90, %93 : vector<8x1xf32>
    %95 = math.rsqrt %94 : vector<8x1xf32>
    %96 = vector.broadcast %95 : vector<8x1xf32> to vector<8x128xf32>
    %97 = arith.mulf %92, %96 : vector<8x128xf32>
    %98 = vector.broadcast %76 : vector<1x128xf32> to vector<8x128xf32>
    %99 = arith.mulf %97, %98 : vector<8x128xf32>
    %100 = vector.broadcast %77 : vector<1x128xf32> to vector<8x128xf32>
    %101 = arith.addf %99, %100 : vector<8x128xf32>
    %cst_29 = arith.constant 0.000000e+00 : f32
    %102 = vector.broadcast %cst_29 : f32 to vector<8x128xf32>
    %103 = arith.maximumf %101, %102 : vector<8x128xf32>
    %c272 = arith.constant 272 : index
    %c0_30 = arith.constant 0 : index
    %104 = vector.load %arg2[%c272, %c0_30] : memref<592x128xbf16, #tpu.memory_space<vmem>>, vector<128x128xbf16>
    %105 = arith.truncf %103 : vector<8x128xf32> to vector<8x128xbf16>
    %cst_31 = arith.constant dense<0.000000e+00> : vector<8x128xf32>
    %106 = tpu.matmul %105, %104, %cst_31 {dimension_numbers = #tpu.dot_dimension_numbers<[1], [0], [0], [1], [0, 0, 1, 1], [], []>} : vector<8x128xbf16>, vector<128x128xbf16>, vector<8x128xf32> -> vector<8x128xf32>
    %107 = vector.extract_strided_slice %1 {offsets = [9, 0], sizes = [1, 128], strides = [1, 1]} : vector<16x128xf32> to vector<1x128xf32>
    %108 = vector.broadcast %107 : vector<1x128xf32> to vector<8x128xf32>
    %109 = arith.addf %106, %108 : vector<8x128xf32>
    %cst_32 = arith.constant 5.000000e-01 : f32
    %110 = vector.broadcast %cst_32 : f32 to vector<8x128xf32>
    %111 = arith.mulf %110, %109 : vector<8x128xf32>
    %112 = math.tanh %111 : vector<8x128xf32>
    %cst_33 = arith.constant 5.000000e-01 : f32
    %113 = vector.broadcast %cst_33 : f32 to vector<8x128xf32>
    %114 = arith.mulf %113, %112 : vector<8x128xf32>
    %cst_34 = arith.constant 5.000000e-01 : f32
    %115 = vector.broadcast %cst_34 : f32 to vector<8x128xf32>
    %116 = arith.addf %114, %115 : vector<8x128xf32>
    %117 = vector.extract_strided_slice %116 {offsets = [0, 0], sizes = [8, 32], strides = [1, 1]} : vector<8x128xf32> to vector<8x32xf32>
    %118 = vector.extract_strided_slice %116 {offsets = [0, 96], sizes = [8, 32], strides = [1, 1]} : vector<8x128xf32> to vector<8x32xf32>
    %119 = vector.extract_strided_slice %109 {offsets = [0, 64], sizes = [8, 32], strides = [1, 1]} : vector<8x128xf32> to vector<8x32xf32>
    %120 = math.tanh %119 : vector<8x32xf32>
    %121 = arith.mulf %117, %120 : vector<8x32xf32>
    %122 = math.tanh %121 : vector<8x32xf32>
    %123 = arith.mulf %118, %122 : vector<8x32xf32>
    %c400 = arith.constant 400 : index
    %c0_35 = arith.constant 0 : index
    %124 = vector.load %arg2[%c400, %c0_35] : memref<592x128xbf16, #tpu.memory_space<vmem>>, vector<32x128xbf16>
    %125 = arith.truncf %123 : vector<8x32xf32> to vector<8x32xbf16>
    %cst_36 = arith.constant dense<0.000000e+00> : vector<8x128xf32>
    %126 = tpu.matmul %125, %124, %cst_36 {dimension_numbers = #tpu.dot_dimension_numbers<[1], [0], [0], [1], [0, 0, 1, 1], [], []>} : vector<8x32xbf16>, vector<32x128xbf16>, vector<8x128xf32> -> vector<8x128xf32>
    %127 = vector.extract_strided_slice %1 {offsets = [10, 0], sizes = [1, 128], strides = [1, 1]} : vector<16x128xf32> to vector<1x128xf32>
    %128 = vector.broadcast %127 : vector<1x128xf32> to vector<8x128xf32>
    %129 = arith.addf %126, %128 : vector<8x128xf32>
    %cst_37 = arith.constant 5.000000e-01 : f32
    %130 = vector.broadcast %cst_37 : f32 to vector<8x128xf32>
    %131 = arith.mulf %130, %129 : vector<8x128xf32>
    %132 = math.tanh %131 : vector<8x128xf32>
    %cst_38 = arith.constant 5.000000e-01 : f32
    %133 = vector.broadcast %cst_38 : f32 to vector<8x128xf32>
    %134 = arith.mulf %133, %132 : vector<8x128xf32>
    %cst_39 = arith.constant 5.000000e-01 : f32
    %135 = vector.broadcast %cst_39 : f32 to vector<8x128xf32>
    %136 = arith.addf %134, %135 : vector<8x128xf32>
    %137 = vector.extract_strided_slice %136 {offsets = [0, 0], sizes = [8, 32], strides = [1, 1]} : vector<8x128xf32> to vector<8x32xf32>
    %138 = vector.extract_strided_slice %136 {offsets = [0, 96], sizes = [8, 32], strides = [1, 1]} : vector<8x128xf32> to vector<8x32xf32>
    %139 = vector.extract_strided_slice %129 {offsets = [0, 64], sizes = [8, 32], strides = [1, 1]} : vector<8x128xf32> to vector<8x32xf32>
    %140 = math.tanh %139 : vector<8x32xf32>
    %141 = arith.mulf %137, %140 : vector<8x32xf32>
    %142 = math.tanh %141 : vector<8x32xf32>
    %143 = arith.mulf %138, %142 : vector<8x32xf32>
    %c432 = arith.constant 432 : index
    %c0_40 = arith.constant 0 : index
    %144 = vector.load %arg2[%c432, %c0_40] : memref<592x128xbf16, #tpu.memory_space<vmem>>, vector<32x128xbf16>
    %145 = arith.truncf %143 : vector<8x32xf32> to vector<8x32xbf16>
    %cst_41 = arith.constant dense<0.000000e+00> : vector<8x128xf32>
    %146 = tpu.matmul %145, %144, %cst_41 {dimension_numbers = #tpu.dot_dimension_numbers<[1], [0], [0], [1], [0, 0, 1, 1], [], []>} : vector<8x32xbf16>, vector<32x128xbf16>, vector<8x128xf32> -> vector<8x128xf32>
    %147 = vector.extract_strided_slice %1 {offsets = [11, 0], sizes = [1, 128], strides = [1, 1]} : vector<16x128xf32> to vector<1x128xf32>
    %148 = vector.broadcast %147 : vector<1x128xf32> to vector<8x128xf32>
    %149 = arith.addf %146, %148 : vector<8x128xf32>
    %150 = vector.extract_strided_slice %1 {offsets = [12, 0], sizes = [1, 128], strides = [1, 1]} : vector<16x128xf32> to vector<1x128xf32>
    %151 = vector.extract_strided_slice %1 {offsets = [13, 0], sizes = [1, 128], strides = [1, 1]} : vector<16x128xf32> to vector<1x128xf32>
    %cst_42 = arith.constant dense<0.000000e+00> : vector<8xf32>
    %152 = vector.multi_reduction <add>, %149, %cst_42 [1] : vector<8x128xf32> to vector<8xf32>
    %153 = vector.shape_cast %152 : vector<8xf32> to vector<8x1xf32>
    %154 = arith.mulf %149, %149 : vector<8x128xf32>
    %cst_43 = arith.constant dense<0.000000e+00> : vector<8xf32>
    %155 = vector.multi_reduction <add>, %154, %cst_43 [1] : vector<8x128xf32> to vector<8xf32>
    %156 = vector.shape_cast %155 : vector<8xf32> to vector<8x1xf32>
    %cst_44 = arith.constant 3.125000e-02 : f32
    %157 = vector.broadcast %cst_44 : f32 to vector<8x1xf32>
    %158 = arith.mulf %153, %157 : vector<8x1xf32>
    %cst_45 = arith.constant 3.125000e-02 : f32
    %159 = vector.broadcast %cst_45 : f32 to vector<8x1xf32>
    %160 = arith.mulf %156, %159 : vector<8x1xf32>
    %161 = arith.mulf %158, %158 : vector<8x1xf32>
    %162 = arith.subf %160, %161 : vector<8x1xf32>
    %cst_46 = arith.constant 0.000000e+00 : f32
    %163 = vector.broadcast %cst_46 : f32 to vector<8x1xf32>
    %164 = arith.maximumf %162, %163 : vector<8x1xf32>
    %165 = vector.broadcast %158 : vector<8x1xf32> to vector<8x128xf32>
    %166 = arith.subf %149, %165 : vector<8x128xf32>
    %cst_47 = arith.constant 9.99999974E-6 : f32
    %167 = vector.broadcast %cst_47 : f32 to vector<8x1xf32>
    %168 = arith.addf %164, %167 : vector<8x1xf32>
    %169 = math.rsqrt %168 : vector<8x1xf32>
    %170 = vector.broadcast %169 : vector<8x1xf32> to vector<8x128xf32>
    %171 = arith.mulf %166, %170 : vector<8x128xf32>
    %172 = vector.broadcast %150 : vector<1x128xf32> to vector<8x128xf32>
    %173 = arith.mulf %171, %172 : vector<8x128xf32>
    %174 = vector.broadcast %151 : vector<1x128xf32> to vector<8x128xf32>
    %175 = arith.addf %173, %174 : vector<8x128xf32>
    %cst_48 = arith.constant 0.000000e+00 : f32
    %176 = vector.broadcast %cst_48 : f32 to vector<8x128xf32>
    %177 = arith.maximumf %175, %176 : vector<8x128xf32>
    %c464 = arith.constant 464 : index
    %c0_49 = arith.constant 0 : index
    %178 = vector.load %arg2[%c464, %c0_49] : memref<592x128xbf16, #tpu.memory_space<vmem>>, vector<128x128xbf16>
    %179 = arith.truncf %177 : vector<8x128xf32> to vector<8x128xbf16>
    %cst_50 = arith.constant dense<0.000000e+00> : vector<8x128xf32>
    %180 = tpu.matmul %179, %178, %cst_50 {dimension_numbers = #tpu.dot_dimension_numbers<[1], [0], [0], [1], [0, 0, 1, 1], [], []>} : vector<8x128xbf16>, vector<128x128xbf16>, vector<8x128xf32> -> vector<8x128xf32>
    %181 = vector.extract_strided_slice %1 {offsets = [14, 0], sizes = [1, 128], strides = [1, 1]} : vector<16x128xf32> to vector<1x128xf32>
    %182 = vector.broadcast %181 : vector<1x128xf32> to vector<8x128xf32>
    %183 = arith.addf %180, %182 : vector<8x128xf32>
    %c0_51 = arith.constant 0 : index
    %c0_52 = arith.constant 0 : index
    %184 = vector.load %arg4[%c0_51, %c0_52] : memref<8x128xf32, #tpu.memory_space<vmem>>, vector<8x128xf32>
    tpu.vector_store %arg4[%c0_51, %c0_52], %183 {strides = array<i32>} : memref<8x128xf32, #tpu.memory_space<vmem>>, vector<8x128xf32>,
    return
  }
  func.func @transform_0(%arg0: i32) -> (i32, i32) {
    %c0_i32 = arith.constant 0 : i32
    %c0_i32_0 = arith.constant 0 : i32
    return %arg0, %c0_i32 : i32, i32
  }
  func.func @transform_1(%arg0: i32) -> (i32, i32) {
    %c0_i32 = arith.constant 0 : i32
    %c0_i32_0 = arith.constant 0 : i32
    %c0_i32_1 = arith.constant 0 : i32
    return %c0_i32, %c0_i32_0 : i32, i32
  }
  func.func @transform_2(%arg0: i32) -> (i32, i32) {
    %c0_i32 = arith.constant 0 : i32
    %c0_i32_0 = arith.constant 0 : i32
    %c0_i32_1 = arith.constant 0 : i32
    return %c0_i32, %c0_i32_0 : i32, i32
  }
  func.func @transform_3(%arg0: i32) -> (i32, i32) {
    %c0_i32 = arith.constant 0 : i32
    %c0_i32_0 = arith.constant 0 : i32
    return %arg0, %c0_i32 : i32, i32
  }
}

</mosaic_0001>

<llo_original>
// kernel: tpu_custom_call.1
$region0: #{tpu_custom_call.1}
  #allocation0 [shape = 'u32[]', space=smem, size = 0x4, offset = 0x4, fixed_abs, tag = 'smem constant byte address 0x4 - core index']
  #allocation1 [shape = 'u32[144,128]{1,0:T(1,128)}', space=vmem, size = 0x12000, scoped, tag = 'internal scratch']
  %s0 = inlined_call_operand.hbm [shape: f32[8,16], index: 0, kind: input, shape index: {}]
  %s1 = inlined_call_operand.hbm [shape: bf16[592,128], index: 1, kind: input, shape index: {}]
  %s2 = inlined_call_operand.hbm [shape: f32[16,128], index: 2, kind: input, shape index: {}]
  %s3 = inlined_call_operand.hbm [shape: f32[8,128], index: 3, kind: output, shape index: {}]
  %s4 = sld [smem:[#allocation0]]
  $region34: #{tpu_custom_call.1} parent=0
    _
  %s6 = ssub.s32 1, %s4
  %s7 = scalar_select 0, %s6, %s4
  $region1: #{tpu_custom_call.1} parent=0
    #allocation2 [shape = 'u8[4096]{0}', space=vmem, size = 0x1000, scoped, tag = 'input window, operand 0, single buffered']
    #allocation3 [shape = 's32[1]{0}', space=sflag, size = 0x4, scoped, tag = 'scoped memory for tpu_custom_call.1']
    #allocation4 [shape = 's32[1]{0}', space=sflag, size = 0x4, scoped, tag = 'scoped memory for tpu_custom_call.1']
    #allocation5 [shape = 'u8[151552]{0}', space=vmem, size = 0x25000, scoped, tag = 'input window, operand 1, single buffered']
    #allocation6 [shape = 's32[1]{0}', space=sflag, size = 0x4, scoped, tag = 'scoped memory for tpu_custom_call.1']
    #allocation7 [shape = 'u8[8192]{0}', space=vmem, size = 0x2000, scoped, tag = 'input window, operand 2, single buffered']
    #allocation8 [shape = 'u8[4096]{0}', space=vmem, size = 0x1000, scoped, tag = 'output window, operand 0, single buffered']
    %8 = vsyncpa [#allocation3], 0
    %9 = vsyncpa [#allocation6], 0
    %10 = vsyncpa [#allocation4], 0
    // Predicated region
    $region2: #{tpu_custom_call.1} parent=1 // pred_check
      _
    $region3: #{tpu_custom_call.1} parent=1 // pred_check_branch
      %12 = sbr.rel (0) target = $region5
    $region4: #{tpu_custom_call.1} parent=1 // pred_region
      %s14 = ssub.s32 128, 128
      %15 = vsyncadd [#allocation3], %s14
      %s17 = sshll.u32 [#allocation2], 4
      %s18 = int_to_ptr.vmem [resolvable:$true] %s17
      %20 = dma.hbm_to_vmem [thread:$0]  %s0, 128, %s18, [#allocation3]
    $region5: #{tpu_custom_call.1} parent=1 // pred_fallthru
      _
    // Predicated region
    $region6: #{tpu_custom_call.1} parent=1 // pred_check
      _
    $region7: #{tpu_custom_call.1} parent=1 // pred_check_branch
      %22 = sbr.rel (0) target = $region9
    $region8: #{tpu_custom_call.1} parent=1 // pred_region
      %s24 = ssub.s32 4736, 4736
      %25 = vsyncadd [#allocation6], %s24
      %s26 = sshll.u32 [#allocation5], 4
      %s27 = int_to_ptr.vmem [resolvable:$true] %s26
      %32 = dma.hbm_to_vmem [thread:$0]  %s1, 4736, %s27, [#allocation6], 64, 64, 4
    $region9: #{tpu_custom_call.1} parent=1 // pred_fallthru
      _
    // Predicated region
    $region10: #{tpu_custom_call.1} parent=1 // pred_check
      _
    $region11: #{tpu_custom_call.1} parent=1 // pred_check_branch
      %34 = sbr.rel (0) target = $region13
    $region12: #{tpu_custom_call.1} parent=1 // pred_region
      %s36 = ssub.s32 256, 256
      %37 = vsyncadd [#allocation6], %s36
      %s38 = sshll.u32 [#allocation7], 4
      %s39 = int_to_ptr.vmem [resolvable:$true] %s38
      %44 = dma.hbm_to_vmem [thread:$0]  %s2, 256, %s39, [#allocation6], 128, 128, 8
    $region13: #{tpu_custom_call.1} parent=1 // pred_fallthru
      _
    // Predicated region
    $region14: #{tpu_custom_call.1} parent=1 // pred_check
      _
    $region15: #{tpu_custom_call.1} parent=1 // pred_check_branch
      %46 = sbr.rel (0) target = $region17
    $region16: #{tpu_custom_call.1} parent=1 // pred_region
      %47 = dma.done [#allocation3], 128
    $region17: #{tpu_custom_call.1} parent=1 // pred_fallthru
      _
    // Predicated region
    $region18: #{tpu_custom_call.1} parent=1 // pred_check
      _
    $region19: #{tpu_custom_call.1} parent=1 // pred_check_branch
      %49 = sbr.rel (0) target = $region21
    $region20: #{tpu_custom_call.1} parent=1 // pred_region
      %50 = dma.done [#allocation6], 4736
    $region21: #{tpu_custom_call.1} parent=1 // pred_fallthru
      _
    // Predicated region
    $region22: #{tpu_custom_call.1} parent=1 // pred_check
      _
    $region23: #{tpu_custom_call.1} parent=1 // pred_check_branch
      %52 = sbr.rel (0) target = $region25
    $region24: #{tpu_custom_call.1} parent=1 // pred_region
      %53 = dma.done [#allocation6], 256
    $region25: #{tpu_custom_call.1} parent=1 // pred_fallthru
      _
    %v55 = vld [vmem:[#allocation2] sm:$0xff]
    %v56 = vld [vmem:[#allocation7] sm:$0xff]
    %v57 = vld [vmem:[#allocation7 + $0x8] sm:$0xff]
    %v58 = vld [vmem:[#allocation5] sm:$0xf]
    %v59 = vld [vmem:[#allocation5 + $0x4] sm:$0xf]
    %v60 = vpack.c.bf16 %v55, %v55
    %v61 = vlaneseq
    %v62 = vshrl.u32 %v61, 7
    %v63 = vsub.s32 0, %v62
    %v64 = vrot.slane %v56, %v63
    %v67 = vunpack.c.l.b16 %v58
    %v68 = vunpack.c.l.b16 %v59
    %v69 = vpack.c.b16 %v68, %v67
    %vm71 = vcmask 130048
    %v73 = vsel %vm71, %v60, 0
    %75 = vmatprep.subr.bf16.mxu0 0
    %76 = vmatpush1.bf16.msra.mxu0 %v69
    %77 = vmatprep.subr.bf16.mxu0 0
    %78 = vmatpush1.bf16.msra.mxu0 0
    %79 = vmatprep.subr.bf16.mxu0 0
    %80 = vmatpush1.bf16.msra.mxu0 0
    %81 = vmatprep.subr.bf16.mxu0 0
    %82 = vmatpush1.bf16.msra.mxu0 0
    %83 = vmatprep.subr.bf16.mxu0 0
    %84 = vmatpush1.bf16.msra.mxu0 0
    %85 = vmatprep.subr.bf16.mxu0 0
    %86 = vmatpush1.bf16.msra.mxu0 0
    %87 = vmatprep.subr.bf16.mxu0 0
    %88 = vmatpush1.bf16.msra.mxu0 0
    %89 = vmatprep.subr.bf16.mxu0 0
    %90 = vmatpush1.bf16.msra.mxu0 0
    %91 = vmatprep.subr.bf16.mxu0 0
    %92 = vmatpush1.bf16.msra.mxu0 0
    %93 = vmatprep.subr.bf16.mxu0 0
    %94 = vmatpush1.bf16.msra.mxu0 0
    %95 = vmatprep.subr.bf16.mxu0 0
    %96 = vmatpush1.bf16.msra.mxu0 0
    %97 = vmatprep.subr.bf16.mxu0 0
    %98 = vmatpush1.bf16.msra.mxu0 0
    %99 = vmatprep.subr.bf16.mxu0 0
    %100 = vmatpush1.bf16.msra.mxu0 0
    %101 = vmatprep.subr.bf16.mxu0 0
    %102 = vmatpush1.bf16.msra.mxu0 0
    %103 = vmatprep.subr.bf16.mxu0 0
    %104 = vmatpush1.bf16.msra.mxu0 0
    %105 = vmatprep.subr.bf16.mxu0 0
    %106 = vmatpush1.bf16.msra.mxu0 0
    %107 = vmatprep.mubr.bf16.mxu0 0
    %108 = vmatmul.mubr.bf16.gmra.mrb[0].mxu0 %v73
    %v109 = vpop.f32.mrb[0].mxu0
    %v110 = vadd.f32 %v64, %v109
    %v111 = vpop.f32.mrb[0].mxu0
    %v112 = vpop.f32.mrb[0].mxu0
    %v113 = vpop.f32.mrb[0].mxu0
    %114 = vdwg.mxu0
    %115 = vadd.xlane.f32.xlu0 %v110
    %v116 = vpop.xlane.xlu0 %115
    %v117 = vmul.f32 %v110, %v110
    %118 = vadd.xlane.f32.xlu0 %v117
    %v119 = vpop.xlane.xlu0 %118
    %v120 = vmul.f32 %v116, 0.0078125
    %v121 = vmul.f32 %v119, 0.0078125
    %v122 = vmul.f32 %v120, %v120
    %v123 = vsub.f32 %v121, %v122
    %v124 = vmax.f32 %v123, 0.0
    %v125 = vsub.f32 %v110, %v120
    %v126 = vadd.f32 %v124, 1e-05
    %v127 = vrsqrt.pop %v126
    %v128 = vmul.f32 %v125, %v127
    %v129 = vlaneseq
    %v130 = vshrl.u32 %v129, 7
    %v131 = vsub.s32 1, %v130
    %v132 = vrot.slane %v56, %v131
    %v133 = vmul.f32 %v128, %v132
    %v134 = vlaneseq
    %v135 = vshrl.u32 %v134, 7
    %v136 = vsub.s32 2, %v135
    %v137 = vrot.slane %v56, %v136
    %v138 = vadd.f32 %v133, %v137
    %v139 = vmax.f32 %v138, 0.0
    %v140 = vld [vmem:[#allocation5 + $0x8] sm:$0xf]
    %v141 = vld [vmem:[#allocation5 + $0xc] sm:$0xf]
    %v142 = vld [vmem:[#allocation5 + $0x10] sm:$0xf]
    %v143 = vld [vmem:[#allocation5 + $0x14] sm:$0xf]
    %v144 = vld [vmem:[#allocation5 + $0x18] sm:$0xf]
    %v145 = vld [vmem:[#allocation5 + $0x1c] sm:$0xf]
    %v146 = vld [vmem:[#allocation5 + $0x20] sm:$0xf]
    %v147 = vld [vmem:[#allocation5 + $0x24] sm:$0xf]
    %v148 = vld [vmem:[#allocation5 + $0x28] sm:$0xf]
    %v149 = vld [vmem:[#allocation5 + $0x2c] sm:$0xf]
    %v150 = vld [vmem:[#allocation5 + $0x30] sm:$0xf]
    %v151 = vld [vmem:[#allocation5 + $0x34] sm:$0xf]
    %v152 = vld [vmem:[#allocation5 + $0x38] sm:$0xf]
    %v153 = vld [vmem:[#allocation5 + $0x3c] sm:$0xf]
    %v154 = vld [vmem:[#allocation5 + $0x40] sm:$0xf]
    %v155 = vld [vmem:[#allocation5 + $0x44] sm:$0xf]
    %v156 = vpack.c.bf16 %v139, %v139
    %v157 = vlaneseq
    %v158 = vshrl.u32 %v157, 7
    %v159 = vsub.s32 3, %v158
    %v160 = vrot.slane %v56, %v159
    %v177 = vunpack.c.l.b16 %v140
    %v178 = vunpack.c.l.b16 %v141
    %v179 = vunpack.c.l.b16 %v142
    %v180 = vunpack.c.l.b16 %v143
    %v181 = vunpack.c.l.b16 %v144
    %v182 = vunpack.c.l.b16 %v145
    %v183 = vunpack.c.l.b16 %v146
    %v184 = vunpack.c.l.b16 %v147
    %v185 = vunpack.c.l.b16 %v148
    %v186 = vunpack.c.l.b16 %v149
    %v187 = vunpack.c.l.b16 %v150
    %v188 = vunpack.c.l.b16 %v151
    %v189 = vunpack.c.l.b16 %v152
    %v190 = vunpack.c.l.b16 %v153
    %v191 = vunpack.c.l.b16 %v154
    %v192 = vunpack.c.l.b16 %v155
    %v193 = vpack.c.b16 %v178, %v177
    %v194 = vpack.c.b16 %v180, %v179
    %v195 = vpack.c.b16 %v182, %v181
    %v196 = vpack.c.b16 %v184, %v183
    %v197 = vpack.c.b16 %v186, %v185
    %v198 = vpack.c.b16 %v188, %v187
    %v199 = vpack.c.b16 %v190, %v189
    %v200 = vpack.c.b16 %v192, %v191
    %209 = vmatprep.subr.bf16.mxu0 0
    %210 = vmatpush1.bf16.msra.mxu0 %v193
    %211 = vmatprep.subr.bf16.mxu0 0
    %212 = vmatpush1.bf16.msra.mxu0 %v194
    %213 = vmatprep.subr.bf16.mxu0 0
    %214 = vmatpush1.bf16.msra.mxu0 %v195
    %215 = vmatprep.subr.bf16.mxu0 0
    %216 = vmatpush1.bf16.msra.mxu0 %v196
    %217 = vmatprep.subr.bf16.mxu0 0
    %218 = vmatpush1.bf16.msra.mxu0 %v197
    %219 = vmatprep.subr.bf16.mxu0 0
    %220 = vmatpush1.bf16.msra.mxu0 %v198
    %221 = vmatprep.subr.bf16.mxu0 0
    %222 = vmatpush1.bf16.msra.mxu0 %v199
    %223 = vmatprep.subr.bf16.mxu0 0
    %224 = vmatpush1.bf16.msra.mxu0 %v200
    %225 = vmatprep.subr.bf16.mxu0 0
    %226 = vmatpush1.bf16.msra.mxu0 0
    %227 = vmatprep.subr.bf16.mxu0 0
    %228 = vmatpush1.bf16.msra.mxu0 0
    %229 = vmatprep.subr.bf16.mxu0 0
    %230 = vmatpush1.bf16.msra.mxu0 0
    %231 = vmatprep.subr.bf16.mxu0 0
    %232 = vmatpush1.bf16.msra.mxu0 0
    %233 = vmatprep.subr.bf16.mxu0 0
    %234 = vmatpush1.bf16.msra.mxu0 0
    %235 = vmatprep.subr.bf16.mxu0 0
    %236 = vmatpush1.bf16.msra.mxu0 0
    %237 = vmatprep.subr.bf16.mxu0 0
    %238 = vmatpush1.bf16.msra.mxu0 0
    %239 = vmatprep.subr.bf16.mxu0 0
    %240 = vmatpush1.bf16.msra.mxu0 0
    %241 = vmatprep.mubr.bf16.mxu0 0
    %242 = vmatmul.mubr.bf16.gmra.mrb[0].mxu0 %v156
    %v243 = vpop.f32.mrb[0].mxu0
    %v244 = vadd.f32 %v160, %v243
    %v245 = vpop.f32.mrb[0].mxu0
    %v246 = vpop.f32.mrb[0].mxu0
    %v247 = vpop.f32.mrb[0].mxu0
    %248 = vdwg.mxu0
    %249 = vadd.xlane.f32.xlu0 %v244
    %v250 = vpop.xlane.xlu0 %249
    %v251 = vmul.f32 %v244, %v244
    %252 = vadd.xlane.f32.xlu0 %v251
    %v253 = vpop.xlane.xlu0 %252
    %v254 = vmul.f32 %v250, 0.015625
    %v255 = vmul.f32 %v253, 0.015625
    %v256 = vmul.f32 %v254, %v254
    %v257 = vsub.f32 %v255, %v256
    %v258 = vmax.f32 %v257, 0.0
    %v259 = vsub.f32 %v244, %v254
    %v260 = vadd.f32 %v258, 1e-05
    %v261 = vrsqrt.pop %v260
    %v262 = vmul.f32 %v259, %v261
    %v263 = vlaneseq
    %v264 = vshrl.u32 %v263, 7
    %v265 = vsub.s32 4, %v264
    %v266 = vrot.slane %v56, %v265
    %v267 = vmul.f32 %v262, %v266
    %v268 = vlaneseq
    %v269 = vshrl.u32 %v268, 7
    %v270 = vsub.s32 5, %v269
    %v271 = vrot.slane %v56, %v270
    %v272 = vadd.f32 %v267, %v271
    %v273 = vmax.f32 %v272, 0.0
    %v274 = vld [vmem:[#allocation5 + $0x48] sm:$0xf]
    %v275 = vld [vmem:[#allocation5 + $0x4c] sm:$0xf]
    %v276 = vld [vmem:[#allocation5 + $0x50] sm:$0xf]
    %v277 = vld [vmem:[#allocation5 + $0x54] sm:$0xf]
    %v278 = vld [vmem:[#allocation5 + $0x58] sm:$0xf]
    %v279 = vld [vmem:[#allocation5 + $0x5c] sm:$0xf]
    %v280 = vld [vmem:[#allocation5 + $0x60] sm:$0xf]
    %v281 = vld [vmem:[#allocation5 + $0x64] sm:$0xf]
    %v282 = vld [vmem:[#allocation5 + $0x68] sm:$0xf]
    %v283 = vld [vmem:[#allocation5 + $0x6c] sm:$0xf]
    %v284 = vld [vmem:[#allocation5 + $0x70] sm:$0xf]
    %v285 = vld [vmem:[#allocation5 + $0x74] sm:$0xf]
    %v286 = vld [vmem:[#allocation5 + $0x78] sm:$0xf]
    %v287 = vld [vmem:[#allocation5 + $0x7c] sm:$0xf]
    %v288 = vld [vmem:[#allocation5 + $0x80] sm:$0xf]
    %v289 = vld [vmem:[#allocation5 + $0x84] sm:$0xf]
    %v290 = vpack.c.bf16 %v273, %v273
    %v291 = vlaneseq
    %v292 = vshrl.u32 %v291, 7
    %v293 = vsub.s32 6, %v292
    %v294 = vrot.slane %v56, %v293
    %v311 = vunpack.c.l.b16 %v274
    %v312 = vunpack.c.l.b16 %v275
    %v313 = vunpack.c.l.b16 %v276
    %v314 = vunpack.c.l.b16 %v277
    %v315 = vunpack.c.l.b16 %v278
    %v316 = vunpack.c.l.b16 %v279
    %v317 = vunpack.c.l.b16 %v280
    %v318 = vunpack.c.l.b16 %v281
    %v319 = vunpack.c.l.b16 %v282
    %v320 = vunpack.c.l.b16 %v283
    %v321 = vunpack.c.l.b16 %v284
    %v322 = vunpack.c.l.b16 %v285
    %v323 = vunpack.c.l.b16 %v286
    %v324 = vunpack.c.l.b16 %v287
    %v325 = vunpack.c.l.b16 %v288
    %v326 = vunpack.c.l.b16 %v289
    %v327 = vpack.c.b16 %v312, %v311
    %v328 = vpack.c.b16 %v314, %v313
    %v329 = vpack.c.b16 %v316, %v315
    %v330 = vpack.c.b16 %v318, %v317
    %v331 = vpack.c.b16 %v320, %v319
    %v332 = vpack.c.b16 %v322, %v321
    %v333 = vpack.c.b16 %v324, %v323
    %v334 = vpack.c.b16 %v326, %v325
    %343 = vmatprep.subr.bf16.mxu0 0
    %344 = vmatpush1.bf16.msra.mxu0 %v327
    %345 = vmatprep.subr.bf16.mxu0 0
    %346 = vmatpush1.bf16.msra.mxu0 %v328
    %347 = vmatprep.subr.bf16.mxu0 0
    %348 = vmatpush1.bf16.msra.mxu0 %v329
    %349 = vmatprep.subr.bf16.mxu0 0
    %350 = vmatpush1.bf16.msra.mxu0 %v330
    %351 = vmatprep.subr.bf16.mxu0 0
    %352 = vmatpush1.bf16.msra.mxu0 %v331
    %353 = vmatprep.subr.bf16.mxu0 0
    %354 = vmatpush1.bf16.msra.mxu0 %v332
    %355 = vmatprep.subr.bf16.mxu0 0
    %356 = vmatpush1.bf16.msra.mxu0 %v333
    %357 = vmatprep.subr.bf16.mxu0 0
    %358 = vmatpush1.bf16.msra.mxu0 %v334
    %359 = vmatprep.subr.bf16.mxu0 0
    %360 = vmatpush1.bf16.msra.mxu0 0
    %361 = vmatprep.subr.bf16.mxu0 0
    %362 = vmatpush1.bf16.msra.mxu0 0
    %363 = vmatprep.subr.bf16.mxu0 0
    %364 = vmatpush1.bf16.msra.mxu0 0
    %365 = vmatprep.subr.bf16.mxu0 0
    %366 = vmatpush1.bf16.msra.mxu0 0
    %367 = vmatprep.subr.bf16.mxu0 0
    %368 = vmatpush1.bf16.msra.mxu0 0
    %369 = vmatprep.subr.bf16.mxu0 0
    %370 = vmatpush1.bf16.msra.mxu0 0
    %371 = vmatprep.subr.bf16.mxu0 0
    %372 = vmatpush1.bf16.msra.mxu0 0
    %373 = vmatprep.subr.bf16.mxu0 0
    %374 = vmatpush1.bf16.msra.mxu0 0
    %375 = vmatprep.mubr.bf16.mxu0 0
    %376 = vmatmul.mubr.bf16.gmra.mrb[0].mxu0 %v290
    %v377 = vpop.f32.mrb[0].mxu0
    %v378 = vadd.f32 %v294, %v377
    %v379 = vpop.f32.mrb[0].mxu0
    %v380 = vpop.f32.mrb[0].mxu0
    %v381 = vpop.f32.mrb[0].mxu0
    %382 = vdwg.mxu0
    %383 = vadd.xlane.f32.xlu0 %v378
    %v384 = vpop.xlane.xlu0 %383
    %v385 = vmul.f32 %v378, %v378
    %386 = vadd.xlane.f32.xlu0 %v385
    %v387 = vpop.xlane.xlu0 %386
    %v388 = vmul.f32 %v384, 0.015625
    %v389 = vmul.f32 %v387, 0.015625
    %v390 = vmul.f32 %v388, %v388
    %v391 = vsub.f32 %v389, %v390
    %v392 = vmax.f32 %v391, 0.0
    %v393 = vsub.f32 %v378, %v388
    %v394 = vadd.f32 %v392, 1e-05
    %v395 = vrsqrt.pop %v394
    %v396 = vmul.f32 %v393, %v395
    %v397 = vlaneseq
    %v398 = vshrl.u32 %v397, 7
    %v399 = vsub.s32 7, %v398
    %v400 = vrot.slane %v56, %v399
    %v401 = vmul.f32 %v396, %v400
    %v402 = vlaneseq
    %v403 = vshrl.u32 %v402, 7
    %v404 = vsub.s32 0, %v403
    %v405 = vrot.slane %v57, %v404
    %v406 = vadd.f32 %v401, %v405
    %v407 = vmax.f32 %v406, 0.0
    %v408 = vld [vmem:[#allocation5 + $0x88] sm:$0xf]
    %v409 = vld [vmem:[#allocation5 + $0x8c] sm:$0xf]
    %v410 = vld [vmem:[#allocation5 + $0x90] sm:$0xf]
    %v411 = vld [vmem:[#allocation5 + $0x94] sm:$0xf]
    %v412 = vld [vmem:[#allocation5 + $0x98] sm:$0xf]
    %v413 = vld [vmem:[#allocation5 + $0x9c] sm:$0xf]
    %v414 = vld [vmem:[#allocation5 + $0xa0] sm:$0xf]
    %v415 = vld [vmem:[#allocation5 + $0xa4] sm:$0xf]
    %v416 = vld [vmem:[#allocation5 + $0xa8] sm:$0xf]
    %v417 = vld [vmem:[#allocation5 + $0xac] sm:$0xf]
    %v418 = vld [vmem:[#allocation5 + $0xb0] sm:$0xf]
    %v419 = vld [vmem:[#allocation5 + $0xb4] sm:$0xf]
    %v420 = vld [vmem:[#allocation5 + $0xb8] sm:$0xf]
    %v421 = vld [vmem:[#allocation5 + $0xbc] sm:$0xf]
    %v422 = vld [vmem:[#allocation5 + $0xc0] sm:$0xf]
    %v423 = vld [vmem:[#allocation5 + $0xc4] sm:$0xf]
    %v424 = vpack.c.bf16 %v407, %v407
    %v425 = vlaneseq
    %v426 = vshrl.u32 %v425, 7
    %v427 = vsub.s32 1, %v426
    %v428 = vrot.slane %v57, %v427
    %v445 = vunpack.c.l.b16 %v408
    %v446 = vunpack.c.l.b16 %v409
    %v447 = vunpack.c.l.b16 %v410
    %v448 = vunpack.c.l.b16 %v411
    %v449 = vunpack.c.l.b16 %v412
    %v450 = vunpack.c.l.b16 %v413
    %v451 = vunpack.c.l.b16 %v414
    %v452 = vunpack.c.l.b16 %v415
    %v453 = vunpack.c.l.b16 %v416
    %v454 = vunpack.c.l.b16 %v417
    %v455 = vunpack.c.l.b16 %v418
    %v456 = vunpack.c.l.b16 %v419
    %v457 = vunpack.c.l.b16 %v420
    %v458 = vunpack.c.l.b16 %v421
    %v459 = vunpack.c.l.b16 %v422
    %v460 = vunpack.c.l.b16 %v423
    %v461 = vpack.c.b16 %v446, %v445
    %v462 = vpack.c.b16 %v448, %v447
    %v463 = vpack.c.b16 %v450, %v449
    %v464 = vpack.c.b16 %v452, %v451
    %v465 = vpack.c.b16 %v454, %v453
    %v466 = vpack.c.b16 %v456, %v455
    %v467 = vpack.c.b16 %v458, %v457
    %v468 = vpack.c.b16 %v460, %v459
    %477 = vmatprep.subr.bf16.mxu0 0
    %478 = vmatpush1.bf16.msra.mxu0 %v461
    %479 = vmatprep.subr.bf16.mxu0 0
    %480 = vmatpush1.bf16.msra.mxu0 %v462
    %481 = vmatprep.subr.bf16.mxu0 0
    %482 = vmatpush1.bf16.msra.mxu0 %v463
    %483 = vmatprep.subr.bf16.mxu0 0
    %484 = vmatpush1.bf16.msra.mxu0 %v464
    %485 = vmatprep.subr.bf16.mxu0 0
    %486 = vmatpush1.bf16.msra.mxu0 %v465
    %487 = vmatprep.subr.bf16.mxu0 0
    %488 = vmatpush1.bf16.msra.mxu0 %v466
    %489 = vmatprep.subr.bf16.mxu0 0
    %490 = vmatpush1.bf16.msra.mxu0 %v467
    %491 = vmatprep.subr.bf16.mxu0 0
    %492 = vmatpush1.bf16.msra.mxu0 %v468
    %493 = vmatprep.subr.bf16.mxu0 0
    %494 = vmatpush1.bf16.msra.mxu0 0
    %495 = vmatprep.subr.bf16.mxu0 0
    %496 = vmatpush1.bf16.msra.mxu0 0
    %497 = vmatprep.subr.bf16.mxu0 0
    %498 = vmatpush1.bf16.msra.mxu0 0
    %499 = vmatprep.subr.bf16.mxu0 0
    %500 = vmatpush1.bf16.msra.mxu0 0
    %501 = vmatprep.subr.bf16.mxu0 0
    %502 = vmatpush1.bf16.msra.mxu0 0
    %503 = vmatprep.subr.bf16.mxu0 0
    %504 = vmatpush1.bf16.msra.mxu0 0
    %505 = vmatprep.subr.bf16.mxu0 0
    %506 = vmatpush1.bf16.msra.mxu0 0
    %507 = vmatprep.subr.bf16.mxu0 0
    %508 = vmatpush1.bf16.msra.mxu0 0
    %509 = vmatprep.mubr.bf16.mxu0 0
    %510 = vmatmul.mubr.bf16.gmra.mrb[0].mxu0 %v424
    %v511 = vpop.f32.mrb[0].mxu0
    %v512 = vadd.f32 %v428, %v511
    %v513 = vpop.f32.mrb[0].mxu0
    %v514 = vpop.f32.mrb[0].mxu0
    %v515 = vpop.f32.mrb[0].mxu0
    %516 = vdwg.mxu0
    %v517 = vmul.f32 %v512, 0.5
    %v518 = vtanh.pop %v517
    %v519 = vmul.f32 %v518, 0.5
    %v520 = vadd.f32 %v519, 0.5
    %v521 = vtanh.pop %v512
    %523 = vrot.lane.b32.xlu0 %v521, 64
    %v524 = vpop.permute.xlu0 %523
    %v526 = vmul.f32 %v520, %v524
    %v527 = vtanh.pop %v526
    %529 = vrot.lane.b32.xlu0 %v527, 96
    %v530 = vpop.permute.xlu0 %529
    %v532 = vmul.f32 %v520, %v530
    %v533 = vld [vmem:[#allocation5 + $0xc8] sm:$0xf]
    %v534 = vld [vmem:[#allocation5 + $0xcc] sm:$0xf]
    %v535 = vld [vmem:[#allocation5 + $0xd0] sm:$0xf]
    %v536 = vld [vmem:[#allocation5 + $0xd4] sm:$0xf]
    %v537 = vpack.c.bf16 %v532, %v532
    %v538 = vlaneseq
    %v539 = vshrl.u32 %v538, 7
    %v540 = vsub.s32 2, %v539
    %v541 = vrot.slane %v57, %v540
    %543 = vrot.lane.b32.xlu0 %v537, 32
    %v544 = vpop.permute.xlu0 %543
    %v549 = vunpack.c.l.b16 %v533
    %v550 = vunpack.c.l.b16 %v534
    %v551 = vunpack.c.l.b16 %v535
    %v552 = vunpack.c.l.b16 %v536
    %v553 = vpack.c.b16 %v550, %v549
    %v554 = vpack.c.b16 %v552, %v551
    %vm557 = vcmask 261120
    %v559 = vsel %vm557, %v544, 0
    %561 = vmatprep.subr.bf16.mxu0 0
    %562 = vmatpush1.bf16.msra.mxu0 %v553
    %563 = vmatprep.subr.bf16.mxu0 0
    %564 = vmatpush1.bf16.msra.mxu0 %v554
    %565 = vmatprep.subr.bf16.mxu0 0
    %566 = vmatpush1.bf16.msra.mxu0 0
    %567 = vmatprep.subr.bf16.mxu0 0
    %568 = vmatpush1.bf16.msra.mxu0 0
    %569 = vmatprep.subr.bf16.mxu0 0
    %570 = vmatpush1.bf16.msra.mxu0 0
    %571 = vmatprep.subr.bf16.mxu0 0
    %572 = vmatpush1.bf16.msra.mxu0 0
    %573 = vmatprep.subr.bf16.mxu0 0
    %574 = vmatpush1.bf16.msra.mxu0 0
    %575 = vmatprep.subr.bf16.mxu0 0
    %576 = vmatpush1.bf16.msra.mxu0 0
    %577 = vmatprep.subr.bf16.mxu0 0
    %578 = vmatpush1.bf16.msra.mxu0 0
    %579 = vmatprep.subr.bf16.mxu0 0
    %580 = vmatpush1.bf16.msra.mxu0 0
    %581 = vmatprep.subr.bf16.mxu0 0
    %582 = vmatpush1.bf16.msra.mxu0 0
    %583 = vmatprep.subr.bf16.mxu0 0
    %584 = vmatpush1.bf16.msra.mxu0 0
    %585 = vmatprep.subr.bf16.mxu0 0
    %586 = vmatpush1.bf16.msra.mxu0 0
    %587 = vmatprep.subr.bf16.mxu0 0
    %588 = vmatpush1.bf16.msra.mxu0 0
    %589 = vmatprep.subr.bf16.mxu0 0
    %590 = vmatpush1.bf16.msra.mxu0 0
    %591 = vmatprep.subr.bf16.mxu0 0
    %592 = vmatpush1.bf16.msra.mxu0 0
    %593 = vmatprep.mubr.bf16.mxu0 0
    %594 = vmatmul.mubr.bf16.gmra.mrb[0].mxu0 %v559
    %v595 = vpop.f32.mrb[0].mxu0
    %v596 = vadd.f32 %v541, %v595
    %v597 = vpop.f32.mrb[0].mxu0
    %v598 = vpop.f32.mrb[0].mxu0
    %v599 = vpop.f32.mrb[0].mxu0
    %600 = vdwg.mxu0
    %v601 = vmul.f32 %v596, 0.5
    %v602 = vtanh.pop %v601
    %v603 = vmul.f32 %v602, 0.5
    %v604 = vadd.f32 %v603, 0.5
    %v605 = vtanh.pop %v596
    %607 = vrot.lane.b32.xlu0 %v605, 64
    %v608 = vpop.permute.xlu0 %607
    %v610 = vmul.f32 %v604, %v608
    %v611 = vtanh.pop %v610
    %613 = vrot.lane.b32.xlu0 %v611, 96
    %v614 = vpop.permute.xlu0 %613
    %v616 = vmul.f32 %v604, %v614
    %v617 = vld [vmem:[#allocation5 + $0xd8] sm:$0xf]
    %v618 = vld [vmem:[#allocation5 + $0xdc] sm:$0xf]
    %v619 = vld [vmem:[#allocation5 + $0xe0] sm:$0xf]
    %v620 = vld [vmem:[#allocation5 + $0xe4] sm:$0xf]
    %v621 = vpack.c.bf16 %v616, %v616
    %v622 = vlaneseq
    %v623 = vshrl.u32 %v622, 7
    %v624 = vsub.s32 3, %v623
    %v625 = vrot.slane %v57, %v624
    %627 = vrot.lane.b32.xlu0 %v621, 32
    %v628 = vpop.permute.xlu0 %627
    %v633 = vunpack.c.l.b16 %v617
    %v634 = vunpack.c.l.b16 %v618
    %v635 = vunpack.c.l.b16 %v619
    %v636 = vunpack.c.l.b16 %v620
    %v637 = vpack.c.b16 %v634, %v633
    %v638 = vpack.c.b16 %v636, %v635
    %v642 = vsel %vm557, %v628, 0
    %644 = vmatprep.subr.bf16.mxu0 0
    %645 = vmatpush1.bf16.msra.mxu0 %v637
    %646 = vmatprep.subr.bf16.mxu0 0
    %647 = vmatpush1.bf16.msra.mxu0 %v638
    %648 = vmatprep.subr.bf16.mxu0 0
    %649 = vmatpush1.bf16.msra.mxu0 0
    %650 = vmatprep.subr.bf16.mxu0 0
    %651 = vmatpush1.bf16.msra.mxu0 0
    %652 = vmatprep.subr.bf16.mxu0 0
    %653 = vmatpush1.bf16.msra.mxu0 0
    %654 = vmatprep.subr.bf16.mxu0 0
    %655 = vmatpush1.bf16.msra.mxu0 0
    %656 = vmatprep.subr.bf16.mxu0 0
    %657 = vmatpush1.bf16.msra.mxu0 0
    %658 = vmatprep.subr.bf16.mxu0 0
    %659 = vmatpush1.bf16.msra.mxu0 0
    %660 = vmatprep.subr.bf16.mxu0 0
    %661 = vmatpush1.bf16.msra.mxu0 0
    %662 = vmatprep.subr.bf16.mxu0 0
    %663 = vmatpush1.bf16.msra.mxu0 0
    %664 = vmatprep.subr.bf16.mxu0 0
    %665 = vmatpush1.bf16.msra.mxu0 0
    %666 = vmatprep.subr.bf16.mxu0 0
    %667 = vmatpush1.bf16.msra.mxu0 0
    %668 = vmatprep.subr.bf16.mxu0 0
    %669 = vmatpush1.bf16.msra.mxu0 0
    %670 = vmatprep.subr.bf16.mxu0 0
    %671 = vmatpush1.bf16.msra.mxu0 0
    %672 = vmatprep.subr.bf16.mxu0 0
    %673 = vmatpush1.bf16.msra.mxu0 0
    %674 = vmatprep.subr.bf16.mxu0 0
    %675 = vmatpush1.bf16.msra.mxu0 0
    %676 = vmatprep.mubr.bf16.mxu0 0
    %677 = vmatmul.mubr.bf16.gmra.mrb[0].mxu0 %v642
    %v678 = vpop.f32.mrb[0].mxu0
    %v679 = vadd.f32 %v625, %v678
    %v680 = vpop.f32.mrb[0].mxu0
    %v681 = vpop.f32.mrb[0].mxu0
    %v682 = vpop.f32.mrb[0].mxu0
    %683 = vdwg.mxu0
    %684 = vadd.xlane.f32.xlu0 %v679
    %v685 = vpop.xlane.xlu0 %684
    %v686 = vmul.f32 %v679, %v679
    %687 = vadd.xlane.f32.xlu0 %v686
    %v688 = vpop.xlane.xlu0 %687
    %v689 = vmul.f32 %v685, 0.03125
    %v690 = vmul.f32 %v688, 0.03125
    %v691 = vmul.f32 %v689, %v689
    %v692 = vsub.f32 %v690, %v691
    %v693 = vmax.f32 %v692, 0.0
    %v694 = vsub.f32 %v679, %v689
    %v695 = vadd.f32 %v693, 1e-05
    %v696 = vrsqrt.pop %v695
    %v697 = vmul.f32 %v694, %v696
    %v698 = vlaneseq
    %v699 = vshrl.u32 %v698, 7
    %v700 = vsub.s32 4, %v699
    %v701 = vrot.slane %v57, %v700
    %v702 = vmul.f32 %v697, %v701
    %v703 = vlaneseq
    %v704 = vshrl.u32 %v703, 7
    %v705 = vsub.s32 5, %v704
    %v706 = vrot.slane %v57, %v705
    %v707 = vadd.f32 %v702, %v706
    %v708 = vmax.f32 %v707, 0.0
    %v709 = vld [vmem:[#allocation5 + $0xe8] sm:$0xf]
    %v710 = vld [vmem:[#allocation5 + $0xec] sm:$0xf]
    %v711 = vld [vmem:[#allocation5 + $0xf0] sm:$0xf]
    %v712 = vld [vmem:[#allocation5 + $0xf4] sm:$0xf]
    %v713 = vld [vmem:[#allocation5 + $0xf8] sm:$0xf]
    %v714 = vld [vmem:[#allocation5 + $0xfc] sm:$0xf]
    %v715 = vld [vmem:[#allocation5 + $0x100] sm:$0xf]
    %v716 = vld [vmem:[#allocation5 + $0x104] sm:$0xf]
    %v717 = vld [vmem:[#allocation5 + $0x108] sm:$0xf]
    %v718 = vld [vmem:[#allocation5 + $0x10c] sm:$0xf]
    %v719 = vld [vmem:[#allocation5 + $0x110] sm:$0xf]
    %v720 = vld [vmem:[#allocation5 + $0x114] sm:$0xf]
    %v721 = vld [vmem:[#allocation5 + $0x118] sm:$0xf]
    %v722 = vld [vmem:[#allocation5 + $0x11c] sm:$0xf]
    %v723 = vld [vmem:[#allocation5 + $0x120] sm:$0xf]
    %v724 = vld [vmem:[#allocation5 + $0x124] sm:$0xf]
    %v725 = vpack.c.bf16 %v708, %v708
    %v726 = vlaneseq
    %v727 = vshrl.u32 %v726, 7
    %v728 = vsub.s32 6, %v727
    %v729 = vrot.slane %v57, %v728
    %v746 = vunpack.c.l.b16 %v709
    %v747 = vunpack.c.l.b16 %v710
    %v748 = vunpack.c.l.b16 %v711
    %v749 = vunpack.c.l.b16 %v712
    %v750 = vunpack.c.l.b16 %v713
    %v751 = vunpack.c.l.b16 %v714
    %v752 = vunpack.c.l.b16 %v715
    %v753 = vunpack.c.l.b16 %v716
    %v754 = vunpack.c.l.b16 %v717
    %v755 = vunpack.c.l.b16 %v718
    %v756 = vunpack.c.l.b16 %v719
    %v757 = vunpack.c.l.b16 %v720
    %v758 = vunpack.c.l.b16 %v721
    %v759 = vunpack.c.l.b16 %v722
    %v760 = vunpack.c.l.b16 %v723
    %v761 = vunpack.c.l.b16 %v724
    %v762 = vpack.c.b16 %v747, %v746
    %v763 = vpack.c.b16 %v749, %v748
    %v764 = vpack.c.b16 %v751, %v750
    %v765 = vpack.c.b16 %v753, %v752
    %v766 = vpack.c.b16 %v755, %v754
    %v767 = vpack.c.b16 %v757, %v756
    %v768 = vpack.c.b16 %v759, %v758
    %v769 = vpack.c.b16 %v761, %v760
    %778 = vmatprep.subr.bf16.mxu0 0
    %779 = vmatpush1.bf16.msra.mxu0 %v762
    %780 = vmatprep.subr.bf16.mxu0 0
    %781 = vmatpush1.bf16.msra.mxu0 %v763
    %782 = vmatprep.subr.bf16.mxu0 0
    %783 = vmatpush1.bf16.msra.mxu0 %v764
    %784 = vmatprep.subr.bf16.mxu0 0
    %785 = vmatpush1.bf16.msra.mxu0 %v765
    %786 = vmatprep.subr.bf16.mxu0 0
    %787 = vmatpush1.bf16.msra.mxu0 %v766
    %788 = vmatprep.subr.bf16.mxu0 0
    %789 = vmatpush1.bf16.msra.mxu0 %v767
    %790 = vmatprep.subr.bf16.mxu0 0
    %791 = vmatpush1.bf16.msra.mxu0 %v768
    %792 = vmatprep.subr.bf16.mxu0 0
    %793 = vmatpush1.bf16.msra.mxu0 %v769
    %794 = vmatprep.subr.bf16.mxu0 0
    %795 = vmatpush1.bf16.msra.mxu0 0
    %796 = vmatprep.subr.bf16.mxu0 0
    %797 = vmatpush1.bf16.msra.mxu0 0
    %798 = vmatprep.subr.bf16.mxu0 0
    %799 = vmatpush1.bf16.msra.mxu0 0
    %800 = vmatprep.subr.bf16.mxu0 0
    %801 = vmatpush1.bf16.msra.mxu0 0
    %802 = vmatprep.subr.bf16.mxu0 0
    %803 = vmatpush1.bf16.msra.mxu0 0
    %804 = vmatprep.subr.bf16.mxu0 0
    %805 = vmatpush1.bf16.msra.mxu0 0
    %806 = vmatprep.subr.bf16.mxu0 0
    %807 = vmatpush1.bf16.msra.mxu0 0
    %808 = vmatprep.subr.bf16.mxu0 0
    %809 = vmatpush1.bf16.msra.mxu0 0
    %810 = vmatprep.mubr.bf16.mxu0 0
    %811 = vmatmul.mubr.bf16.gmra.mrb[0].mxu0 %v725
    %v812 = vpop.f32.mrb[0].mxu0
    %v813 = vadd.f32 %v729, %v812
    %v814 = vpop.f32.mrb[0].mxu0
    %v815 = vpop.f32.mrb[0].mxu0
    %v816 = vpop.f32.mrb[0].mxu0
    %817 = vdwg.mxu0
    %818 = vst [vmem:[#allocation8] sm:$0xff] %v813
    // Predicated region
    $region26: #{tpu_custom_call.1} parent=1 // pred_check
      _
    $region27: #{tpu_custom_call.1} parent=1 // pred_check_branch
      %820 = sbr.rel (0) target = $region29
    $region28: #{tpu_custom_call.1} parent=1 // pred_region
      %s822 = ssub.s32 128, 128
      %823 = vsyncadd [#allocation4], %s822
      %s825 = sshll.u32 [#allocation8], 4
      %s826 = int_to_ptr.vmem [resolvable:$true] %s825
      %828 = dma.vmem_to_hbm [thread:$0]  %s826, 128, %s3, [#allocation4]
    $region29: #{tpu_custom_call.1} parent=1 // pred_fallthru
      _
    // Predicated region
    $region30: #{tpu_custom_call.1} parent=1 // pred_check
      _
    $region31: #{tpu_custom_call.1} parent=1 // pred_check_branch
      %830 = sbr.rel (0) target = $region33
    $region32: #{tpu_custom_call.1} parent=1 // pred_region
      %831 = dma.done [#allocation4], 128
    $region33: #{tpu_custom_call.1} parent=1 // pred_fallthru
      _
    %832 = vsyncpa [#allocation3], 1
    %833 = vsyncpa [#allocation6], 1
    %834 = vsyncpa [#allocation4], 1

</llo_original>
